<compile_context>
chip_gen: v6e
topology: v6e:2x2x1
jax: 0.10.0
libtpu: 0.0.40
codegen_flags: <defaults>
</compile_context>

<pallas_src>
import numpy as np
import jax
import jax.numpy as jnp
from jax.experimental import pallas as pl
from jax.experimental.pallas import tpu as pltpu


LATENT_DIM = 2
HIDDEN = 256
OUT = 28 * 28  # 784
_ALIGN = 16    # sublane alignment that covers both bf16 (16) and f32 (8) output blocks


def _round_up(x, m):
    return ((x + m - 1) // m) * m


def _decoder_kernel(z_ref, w1_ref, b1_ref, w2_ref, b2_ref, o_ref):
    # z_ref: [TB, L] f32, w1_ref: [L, 256] f32, b1_ref: [1, 256] f32
    # w2_ref: [256, 784] bf16, b2_ref: [1, 784] f32, o_ref: [TB, 784] out_dtype (bf16 by default)
    z = z_ref[...]
    w1 = w1_ref[...]
    latent = w1.shape[0]

    # Layer 1 on the VPU: contraction dim (latent=2) is tiny, so the MXU would run at ~2/256
    # K-utilization. Unrolled broadcast-FMAs are cheaper and remove a serialized MXU dependency
    # ahead of the big matmul.
    acc = z[:, 0:1] * w1[0:1, :]
    for i in range(1, latent):
        acc = acc + z[:, i:i + 1] * w1[i:i + 1, :]
    h = jnp.maximum(acc + b1_ref[...], 0.0)  # ReLU, f32

    # Layer 2 on the MXU: bf16 inputs (native), f32 accumulation.
    y = jnp.dot(h.astype(jnp.bfloat16), w2_ref[...],
                preferred_element_type=jnp.float32) + b2_ref[...]

    # Sigmoid via a single EUP transcendental: sigmoid(y) = 0.5*tanh(0.5*y) + 0.5.
    # (1 EUP push/element instead of exp+reciprocal = 2; also overflow-free.)
    o_ref[...] = (jnp.tanh(y * 0.5) * 0.5 + 0.5).astype(o_ref.dtype)


def _choose_tiling(B, tb_max):
    """Grid-first tile selection: caps padding at <~ one tile and keeps >=2 grid steps for
    large batches so v7x's two TensorCores both get work."""
    tb_max = max(_ALIGN, _round_up(min(tb_max, B), _ALIGN))
    g = pl.cdiv(B, tb_max)
    if B >= 2 * _ALIGN:
        g = max(g, 2)
    tb = _round_up(pl.cdiv(B, g), _ALIGN)
    g = pl.cdiv(B, tb)
    return tb, g


def mlp_decoder_forward(z, w1, b1, w2, b2, *, tb=1024, out_dtype=jnp.bfloat16):
    """z: [B, latent_dim] f32 -> [B, 1, 28, 28] in out_dtype (bf16 by default)."""
    B, L = z.shape

    tb, g = _choose_tiling(B, tb)
    b_pad = g * tb
    if b_pad != B:
        # Only the tiny input stream gets padded; the output keeps its exact B rows and the
        # final ragged tile's out-of-bounds rows are masked on store by Pallas.
        z = jnp.pad(z, ((0, b_pad - B), (0, 0)))

    out_itemsize = np.dtype(out_dtype).itemsize
    bytes_accessed = (
        b_pad * L * 4                      # z read
        + B * OUT * out_itemsize           # output write (bf16 by default)
        + w1.size * w1.dtype.itemsize
        + b1.size * b1.dtype.itemsize
        + w2.size * w2.dtype.itemsize      # bf16 -> half the f32 traffic
        + b2.size * b2.dtype.itemsize
    )
    cost = pl.CostEstimate(
        flops=2 * B * HIDDEN * OUT + 2 * B * L * HIDDEN,
        transcendentals=B * OUT,           # one tanh per output element
        bytes_accessed=bytes_accessed,
    )

    out_flat = pl.pallas_call(
        _decoder_kernel,
        out_shape=jax.ShapeDtypeStruct((B, OUT), out_dtype),
        grid=(g,),
        in_specs=[
            pl.BlockSpec((tb, L), lambda i: (i, 0)),        # z: tiled over batch
            pl.BlockSpec(w1.shape, lambda i: (0, 0)),       # weights: VMEM-resident across steps
            pl.BlockSpec(b1.shape, lambda i: (0, 0)),
            pl.BlockSpec(w2.shape, lambda i: (0, 0)),
            pl.BlockSpec(b2.shape, lambda i: (0, 0)),
        ],
        out_specs=pl.BlockSpec((tb, OUT), lambda i: (i, 0)),
        compiler_params=pltpu.CompilerParams(
            dimension_semantics=("parallel",),              # 2 TCs on v7x; no-op on v5e/v6e
            vmem_limit_bytes=32 * 1024 * 1024,
        ),
        cost_estimate=cost,
    )(z, w1, b1, w2, b2)

    # nn.Unflatten(dim=1, (1, 28, 28)) -> NCHW (free metadata reshape)
    return out_flat.reshape(B, 1, 28, 28)


def init_params(key, latent_dim=LATENT_DIM):
    """Deterministic init mimicking torch.nn.Linear defaults (uniform(-1/sqrt(fan_in), +))."""
    k1, k2, k3, k4 = jax.random.split(key, 4)
    bound1 = 1.0 / jnp.sqrt(latent_dim)
    bound2 = 1.0 / jnp.sqrt(HIDDEN)
    w1 = jax.random.uniform(k1, (latent_dim, HIDDEN), jnp.float32, -bound1, bound1)
    b1 = jax.random.uniform(k2, (1, HIDDEN), jnp.float32, -bound1, bound1)
    # w2 stored bf16: dominant HBM read + VMEM residency, MXU-native input dtype.
    w2 = jax.random.uniform(k3, (HIDDEN, OUT), jnp.float32, -bound2, bound2).astype(jnp.bfloat16)
    b2 = jax.random.uniform(k4, (1, OUT), jnp.float32, -bound2, bound2)
    return w1, b1, w2, b2


if __name__ == "__main__":
    key = jax.random.PRNGKey(0)
    kz, kp = jax.random.split(key)

    B = 2
    z = jax.random.normal(kz, (B, LATENT_DIM), jnp.float32)
    w1, b1, w2, b2 = init_params(kp)

    out = mlp_decoder_forward(z, w1, b1, w2, b2)
    out = jax.block_until_ready(out)

    # Reference check in plain JAX (same weights; w2's bf16 values cast back to f32).
    h_ref = jnp.maximum(z @ w1 + b1, 0.0)
    y_ref = jax.nn.sigmoid(h_ref @ w2.astype(jnp.float32) + b2).reshape(B, 1, 28, 28)
    assert out.shape == (B, 1, 28, 28), out.shape
    # bf16 w2, bf16 activations into the MXU, tanh-form sigmoid, bf16 output store:
    # small absolute error on a [0,1]-ranged output.
    assert jnp.allclose(out.astype(jnp.float32), y_ref, atol=2e-2), "mismatch vs reference"

    print("KERNEL_OK")
</pallas_src>

<mosaic_0001>
module attributes {stable_mosaic.version = 11 : i64} {
  func.func @_decoder_kernel(%arg0: i32, %arg1: memref<16x2xf32, #tpu.memory_space<vmem>>, %arg2: memref<2x256xf32, #tpu.memory_space<vmem>>, %arg3: memref<1x256xf32, #tpu.memory_space<vmem>>, %arg4: memref<256x784xbf16, #tpu.memory_space<vmem>>, %arg5: memref<1x784xf32, #tpu.memory_space<vmem>>, %arg6: memref<16x784xbf16, #tpu.memory_space<vmem>>) attributes {dimension_semantics = [#tpu.dimension_semantics<parallel>], iteration_bounds = array<i64: 1>, scalar_prefetch = 0 : i64, scratch_operands = 0 : i64, tpu.core_type = #tpu.core_type<tc>, window_params = [{transform_indices = @transform_0, window_bounds = array<i64: 16, 2>}, {pipeline_mode = #tpu.pipeline_mode<synchronous>, transform_indices = @transform_1, window_bounds = array<i64: 2, 256>}, {pipeline_mode = #tpu.pipeline_mode<synchronous>, transform_indices = @transform_2, window_bounds = array<i64: 1, 256>}, {pipeline_mode = #tpu.pipeline_mode<synchronous>, transform_indices = @transform_3, window_bounds = array<i64: 256, 784>}, {pipeline_mode = #tpu.pipeline_mode<synchronous>, transform_indices = @transform_4, window_bounds = array<i64: 1, 784>}, {transform_indices = @transform_5, window_bounds = array<i64: 16, 784>}]} {
    %c0 = arith.constant 0 : index
    %c0_0 = arith.constant 0 : index
    %0 = vector.load %arg1[%c0, %c0_0] : memref<16x2xf32, #tpu.memory_space<vmem>>, vector<16x2xf32>
    %c0_1 = arith.constant 0 : index
    %c0_2 = arith.constant 0 : index
    %1 = vector.load %arg2[%c0_1, %c0_2] : memref<2x256xf32, #tpu.memory_space<vmem>>, vector<2x256xf32>
    %2 = vector.extract_strided_slice %0 {offsets = [0, 0], sizes = [16, 1], strides = [1, 1]} : vector<16x2xf32> to vector<16x1xf32>
    %3 = vector.extract_strided_slice %1 {offsets = [0, 0], sizes = [1, 256], strides = [1, 1]} : vector<2x256xf32> to vector<1x256xf32>
    %4 = vector.broadcast %2 : vector<16x1xf32> to vector<16x256xf32>
    %5 = vector.broadcast %3 : vector<1x256xf32> to vector<16x256xf32>
    %6 = arith.mulf %4, %5 : vector<16x256xf32>
    %7 = vector.extract_strided_slice %0 {offsets = [0, 1], sizes = [16, 1], strides = [1, 1]} : vector<16x2xf32> to vector<16x1xf32>
    %8 = vector.extract_strided_slice %1 {offsets = [1, 0], sizes = [1, 256], strides = [1, 1]} : vector<2x256xf32> to vector<1x256xf32>
    %9 = vector.broadcast %7 : vector<16x1xf32> to vector<16x256xf32>
    %10 = vector.broadcast %8 : vector<1x256xf32> to vector<16x256xf32>
    %11 = arith.mulf %9, %10 : vector<16x256xf32>
    %12 = arith.addf %6, %11 : vector<16x256xf32>
    %c0_3 = arith.constant 0 : index
    %c0_4 = arith.constant 0 : index
    %13 = vector.load %arg3[%c0_3, %c0_4] : memref<1x256xf32, #tpu.memory_space<vmem>>, vector<1x256xf32>
    %14 = vector.broadcast %13 : vector<1x256xf32> to vector<16x256xf32>
    %15 = arith.addf %12, %14 : vector<16x256xf32>
    %cst = arith.constant 0.000000e+00 : f32
    %16 = vector.broadcast %cst : f32 to vector<16x256xf32>
    %17 = arith.maximumf %15, %16 : vector<16x256xf32>
    %18 = arith.truncf %17 : vector<16x256xf32> to vector<16x256xbf16>
    %c0_5 = arith.constant 0 : index
    %c0_6 = arith.constant 0 : index
    %19 = vector.load %arg4[%c0_5, %c0_6] : memref<256x784xbf16, #tpu.memory_space<vmem>>, vector<256x784xbf16>
    %cst_7 = arith.constant dense<0.000000e+00> : vector<16x784xf32>
    %20 = tpu.matmul %18, %19, %cst_7 {dimension_numbers = #tpu.dot_dimension_numbers<[1], [0], [0], [1], [0, 0, 1, 1], [], []>} : vector<16x256xbf16>, vector<256x784xbf16>, vector<16x784xf32> -> vector<16x784xf32>
    %c0_8 = arith.constant 0 : index
    %c0_9 = arith.constant 0 : index
    %21 = vector.load %arg5[%c0_8, %c0_9] : memref<1x784xf32, #tpu.memory_space<vmem>>, vector<1x784xf32>
    %22 = vector.broadcast %21 : vector<1x784xf32> to vector<16x784xf32>
    %23 = arith.addf %20, %22 : vector<16x784xf32>
    %cst_10 = arith.constant 5.000000e-01 : f32
    %24 = vector.broadcast %cst_10 : f32 to vector<16x784xf32>
    %25 = arith.mulf %23, %24 : vector<16x784xf32>
    %26 = math.tanh %25 : vector<16x784xf32>
    %cst_11 = arith.constant 5.000000e-01 : f32
    %27 = vector.broadcast %cst_11 : f32 to vector<16x784xf32>
    %28 = arith.mulf %26, %27 : vector<16x784xf32>
    %cst_12 = arith.constant 5.000000e-01 : f32
    %29 = vector.broadcast %cst_12 : f32 to vector<16x784xf32>
    %30 = arith.addf %28, %29 : vector<16x784xf32>
    %31 = arith.truncf %30 : vector<16x784xf32> to vector<16x784xbf16>
    %c0_13 = arith.constant 0 : index
    %c0_14 = arith.constant 0 : index
    %32 = vector.load %arg6[%c0_13, %c0_14] : memref<16x784xbf16, #tpu.memory_space<vmem>>, vector<16x784xbf16>
    tpu.vector_store %arg6[%c0_13, %c0_14], %31 {strides = array<i32>} : memref<16x784xbf16, #tpu.memory_space<vmem>>, vector<16x784xbf16>,
    return
  }
  func.func @transform_0(%arg0: i32) -> (i32, i32) {
    %c0_i32 = arith.constant 0 : i32
    %c0_i32_0 = arith.constant 0 : i32
    return %arg0, %c0_i32 : i32, i32
  }
  func.func @transform_1(%arg0: i32) -> (i32, i32) {
    %c0_i32 = arith.constant 0 : i32
    %c0_i32_0 = arith.constant 0 : i32
    %c0_i32_1 = arith.constant 0 : i32
    return %c0_i32, %c0_i32_0 : i32, i32
  }
  func.func @transform_2(%arg0: i32) -> (i32, i32) {
    %c0_i32 = arith.constant 0 : i32
    %c0_i32_0 = arith.constant 0 : i32
    %c0_i32_1 = arith.constant 0 : i32
    return %c0_i32, %c0_i32_0 : i32, i32
  }
  func.func @transform_3(%arg0: i32) -> (i32, i32) {
    %c0_i32 = arith.constant 0 : i32
    %c0_i32_0 = arith.constant 0 : i32
    %c0_i32_1 = arith.constant 0 : i32
    return %c0_i32, %c0_i32_0 : i32, i32
  }
  func.func @transform_4(%arg0: i32) -> (i32, i32) {
    %c0_i32 = arith.constant 0 : i32
    %c0_i32_0 = arith.constant 0 : i32
    %c0_i32_1 = arith.constant 0 : i32
    return %c0_i32, %c0_i32_0 : i32, i32
  }
  func.func @transform_5(%arg0: i32) -> (i32, i32) {
    %c0_i32 = arith.constant 0 : i32
    %c0_i32_0 = arith.constant 0 : i32
    return %arg0, %c0_i32 : i32, i32
  }
}

</mosaic_0001>

<llo_original>
// kernel: tpu_custom_call.1
$region0: #{tpu_custom_call.1}
  #allocation0 [shape = 'u32[]', space=smem, size = 0x4, offset = 0x4, fixed_abs, tag = 'smem constant byte address 0x4 - core index']
  #allocation1 [shape = 'u32[144,128]{1,0:T(1,128)}', space=vmem, size = 0x12000, scoped, tag = 'internal scratch']
  %s0 = inlined_call_operand.vmem [shape: f32[16,2], index: 0, kind: input, shape index: {}]
  %s1 = inlined_call_operand.vmem [shape: f32[2,256], index: 1, kind: input, shape index: {}]
  %s2 = inlined_call_operand.vmem [shape: f32[1,256], index: 2, kind: input, shape index: {}]
  %s3 = inlined_call_operand.vmem [shape: bf16[256,784], index: 3, kind: input, shape index: {}]
  %s4 = inlined_call_operand.vmem [shape: f32[1,784], index: 4, kind: input, shape index: {}]
  %s5 = inlined_call_operand.hbm [shape: bf16[2,784], index: 5, kind: output, shape index: {}]
  %s6 = sld [smem:[#allocation0]]
  $region30: #{tpu_custom_call.1} parent=0
    _
  %s8 = ssub.s32 1, %s6
  %s9 = scalar_select 0, %s8, %s6
  $region1: #{tpu_custom_call.1} parent=0
    #allocation2 [shape = 'u8[28672]{0}', space=vmem, size = 0x7000, scoped, tag = 'output window, operand 0, single buffered']
    #allocation3 [shape = 's32[1]{0}', space=sflag, size = 0x4, scoped, tag = 'scoped memory for tpu_custom_call.1']
    %10 = vsyncpa [#allocation3], 0
    // Predicated region
    $region2: #{tpu_custom_call.1} parent=1 // pred_check
      _
    $region3: #{tpu_custom_call.1} parent=1 // pred_check_branch
      %12 = sbr.rel (0) target = $region5
    $region4: #{tpu_custom_call.1} parent=1 // pred_region
      _
    $region5: #{tpu_custom_call.1} parent=1 // pred_fallthru
      _
    // Predicated region
    $region6: #{tpu_custom_call.1} parent=1 // pred_check
      _
    $region7: #{tpu_custom_call.1} parent=1 // pred_check_branch
      %14 = sbr.rel (0) target = $region9
    $region8: #{tpu_custom_call.1} parent=1 // pred_region
      _
    $region9: #{tpu_custom_call.1} parent=1 // pred_fallthru
      _
    // Predicated region
    $region10: #{tpu_custom_call.1} parent=1 // pred_check
      _
    $region11: #{tpu_custom_call.1} parent=1 // pred_check_branch
      %16 = sbr.rel (0) target = $region13
    $region12: #{tpu_custom_call.1} parent=1 // pred_region
      _
    $region13: #{tpu_custom_call.1} parent=1 // pred_fallthru
      _
    // Predicated region
    $region14: #{tpu_custom_call.1} parent=1 // pred_check
      _
    $region15: #{tpu_custom_call.1} parent=1 // pred_check_branch
      %18 = sbr.rel (0) target = $region17
    $region16: #{tpu_custom_call.1} parent=1 // pred_region
      _
    $region17: #{tpu_custom_call.1} parent=1 // pred_fallthru
      _
    // Predicated region
    $region18: #{tpu_custom_call.1} parent=1 // pred_check
      _
    $region19: #{tpu_custom_call.1} parent=1 // pred_check_branch
      %20 = sbr.rel (0) target = $region21
    $region20: #{tpu_custom_call.1} parent=1 // pred_region
      _
    $region21: #{tpu_custom_call.1} parent=1 // pred_fallthru
      _
    %v22 = vld [vmem:[%s0] sm:$0xff]
    %v23 = vld [vmem:[%s0 + $0x8] sm:$0xff]
    %v24 = vld [vmem:[%s1] sm:$0xf]
    %26 = vset.pattern.permute.xlu0 0
    %27 = vperm.xlu0 %26, %v22
    %v28 = vpop.permute.xlu0 %27
    %31 = vset.pattern.permute.xlu0 0
    %32 = vperm.xlu0 %31, %v23
    %v33 = vpop.permute.xlu0 %32
    %v36 = vlaneseq
    %v37 = vshrl.u32 %v36, 7
    %v38 = vsub.s32 0, %v37
    %v39 = vrot.slane %v24, %v38
    %v40 = vlaneseq
    %v41 = vshrl.u32 %v40, 7
    %v42 = vsub.s32 2, %v41
    %v43 = vrot.slane %v24, %v42
    %v46 = vlaneseq
    %v47 = vshrl.u32 %v46, 7
    %v48 = vsub.s32 0, %v47
    %v49 = vrot.slane %v39, %v48
    %v50 = vlaneseq
    %v51 = vshrl.u32 %v50, 7
    %v52 = vsub.s32 0, %v51
    %v53 = vrot.slane %v43, %v52
    %v54 = vmul.f32 %v28, %v49
    %v55 = vmul.f32 %v28, %v53
    %v56 = vmul.f32 %v33, %v49
    %v57 = vmul.f32 %v33, %v53
    %58 = vset.pattern.permute.xlu0 1
    %59 = vperm.xlu0 %58, %v22
    %v60 = vpop.permute.xlu0 %59
    %62 = vset.pattern.permute.xlu0 1
    %63 = vperm.xlu0 %62, %v23
    %v64 = vpop.permute.xlu0 %63
    %v66 = vlaneseq
    %v67 = vshrl.u32 %v66, 7
    %v68 = vsub.s32 1, %v67
    %v69 = vrot.slane %v24, %v68
    %v70 = vlaneseq
    %v71 = vshrl.u32 %v70, 7
    %v72 = vsub.s32 3, %v71
    %v73 = vrot.slane %v24, %v72
    %v76 = vlaneseq
    %v77 = vshrl.u32 %v76, 7
    %v78 = vsub.s32 1, %v77
    %v79 = vrot.slane %v69, %v78
    %v80 = vlaneseq
    %v81 = vshrl.u32 %v80, 7
    %v82 = vsub.s32 1, %v81
    %v83 = vrot.slane %v73, %v82
    %v84 = vmul.f32 %v60, %v79
    %v85 = vmul.f32 %v60, %v83
    %v86 = vmul.f32 %v64, %v79
    %v87 = vmul.f32 %v64, %v83
    %v88 = vadd.f32 %v54, %v84
    %v89 = vadd.f32 %v55, %v85
    %v90 = vadd.f32 %v56, %v86
    %v91 = vadd.f32 %v57, %v87
    %v92 = vld [vmem:[%s2] sm:$0x3]
    %v94 = vlaneseq
    %v95 = vshrl.u32 %v94, 7
    %v96 = vsub.s32 0, %v95
    %v97 = vrot.slane %v92, %v96
    %v98 = vlaneseq
    %v99 = vshrl.u32 %v98, 7
    %v100 = vsub.s32 1, %v99
    %v101 = vrot.slane %v92, %v100
    %v104 = vadd.f32 %v88, %v97
    %v105 = vadd.f32 %v89, %v101
    %v106 = vadd.f32 %v90, %v97
    %v107 = vadd.f32 %v91, %v101
    %v108 = vmax.f32 %v104, 0.0
    %v109 = vmax.f32 %v105, 0.0
    %v110 = vmax.f32 %v106, 0.0
    %v111 = vmax.f32 %v107, 0.0
    %v112 = vpack.c.bf16 %v110, %v108
    %v113 = vpack.c.bf16 %v111, %v109
    %v114 = vld [vmem:[%s3] sm:$0xff]
    %v115 = vld [vmem:[%s3 + $0x8] sm:$0xff]
    %v116 = vld [vmem:[%s3 + $0x10] sm:$0xff]
    %v117 = vld [vmem:[%s3 + $0x18] sm:$0xf]
    %v118 = vld [vmem:[%s3 + $0x1c] sm:$0xff]
    %v119 = vld [vmem:[%s3 + $0x24] sm:$0xff]
    %v120 = vld [vmem:[%s3 + $0x2c] sm:$0xff]
    %v121 = vld [vmem:[%s3 + $0x34] sm:$0xf]
    %v122 = vld [vmem:[%s3 + $0x38] sm:$0xff]
    %v123 = vld [vmem:[%s3 + $0x40] sm:$0xff]
    %v124 = vld [vmem:[%s3 + $0x48] sm:$0xff]
    %v125 = vld [vmem:[%s3 + $0x50] sm:$0xf]
    %v126 = vld [vmem:[%s3 + $0x54] sm:$0xff]
    %v127 = vld [vmem:[%s3 + $0x5c] sm:$0xff]
    %v128 = vld [vmem:[%s3 + $0x64] sm:$0xff]
    %v129 = vld [vmem:[%s3 + $0x6c] sm:$0xf]
    %v130 = vld [vmem:[%s3 + $0x70] sm:$0xff]
    %v131 = vld [vmem:[%s3 + $0x78] sm:$0xff]
    %v132 = vld [vmem:[%s3 + $0x80] sm:$0xff]
    %v133 = vld [vmem:[%s3 + $0x88] sm:$0xf]
    %v134 = vld [vmem:[%s3 + $0x8c] sm:$0xff]
    %v135 = vld [vmem:[%s3 + $0x94] sm:$0xff]
    %v136 = vld [vmem:[%s3 + $0x9c] sm:$0xff]
    %v137 = vld [vmem:[%s3 + $0xa4] sm:$0xf]
    %v138 = vld [vmem:[%s3 + $0xa8] sm:$0xff]
    %v139 = vld [vmem:[%s3 + $0xb0] sm:$0xff]
    %v140 = vld [vmem:[%s3 + $0xb8] sm:$0xff]
    %v141 = vld [vmem:[%s3 + $0xc0] sm:$0xf]
    %v142 = vld [vmem:[%s3 + $0xc4] sm:$0xff]
    %v143 = vld [vmem:[%s3 + $0xcc] sm:$0xff]
    %v144 = vld [vmem:[%s3 + $0xd4] sm:$0xff]
    %v145 = vld [vmem:[%s3 + $0xdc] sm:$0xf]
    %v146 = vld [vmem:[%s3 + $0xe0] sm:$0xff]
    %v147 = vld [vmem:[%s3 + $0xe8] sm:$0xff]
    %v148 = vld [vmem:[%s3 + $0xf0] sm:$0xff]
    %v149 = vld [vmem:[%s3 + $0xf8] sm:$0xf]
    %v150 = vld [vmem:[%s3 + $0xfc] sm:$0xff]
    %v151 = vld [vmem:[%s3 + $0x104] sm:$0xff]
    %v152 = vld [vmem:[%s3 + $0x10c] sm:$0xff]
    %v153 = vld [vmem:[%s3 + $0x114] sm:$0xf]
    %v154 = vld [vmem:[%s3 + $0x118] sm:$0xff]
    %v155 = vld [vmem:[%s3 + $0x120] sm:$0xff]
    %v156 = vld [vmem:[%s3 + $0x128] sm:$0xff]
    %v157 = vld [vmem:[%s3 + $0x130] sm:$0xf]
    %v158 = vld [vmem:[%s3 + $0x134] sm:$0xff]
    %v159 = vld [vmem:[%s3 + $0x13c] sm:$0xff]
    %v160 = vld [vmem:[%s3 + $0x144] sm:$0xff]
    %v161 = vld [vmem:[%s3 + $0x14c] sm:$0xf]
    %v162 = vld [vmem:[%s3 + $0x150] sm:$0xff]
    %v163 = vld [vmem:[%s3 + $0x158] sm:$0xff]
    %v164 = vld [vmem:[%s3 + $0x160] sm:$0xff]
    %v165 = vld [vmem:[%s3 + $0x168] sm:$0xf]
    %v166 = vld [vmem:[%s3 + $0x16c] sm:$0xff]
    %v167 = vld [vmem:[%s3 + $0x174] sm:$0xff]
    %v168 = vld [vmem:[%s3 + $0x17c] sm:$0xff]
    %v169 = vld [vmem:[%s3 + $0x184] sm:$0xf]
    %v170 = vld [vmem:[%s3 + $0x188] sm:$0xff]
    %v171 = vld [vmem:[%s3 + $0x190] sm:$0xff]
    %v172 = vld [vmem:[%s3 + $0x198] sm:$0xff]
    %v173 = vld [vmem:[%s3 + $0x1a0] sm:$0xf]
    %v174 = vld [vmem:[%s3 + $0x1a4] sm:$0xff]
    %v175 = vld [vmem:[%s3 + $0x1ac] sm:$0xff]
    %v176 = vld [vmem:[%s3 + $0x1b4] sm:$0xff]
    %v177 = vld [vmem:[%s3 + $0x1bc] sm:$0xf]
    %v178 = vld [vmem:[%s3 + $0x1c0] sm:$0xff]
    %v179 = vld [vmem:[%s3 + $0x1c8] sm:$0xff]
    %v180 = vld [vmem:[%s3 + $0x1d0] sm:$0xff]
    %v181 = vld [vmem:[%s3 + $0x1d8] sm:$0xf]
    %v182 = vld [vmem:[%s3 + $0x1dc] sm:$0xff]
    %v183 = vld [vmem:[%s3 + $0x1e4] sm:$0xff]
    %v184 = vld [vmem:[%s3 + $0x1ec] sm:$0xff]
    %v185 = vld [vmem:[%s3 + $0x1f4] sm:$0xf]
    %v186 = vld [vmem:[%s3 + $0x1f8] sm:$0xff]
    %v187 = vld [vmem:[%s3 + $0x200] sm:$0xff]
    %v188 = vld [vmem:[%s3 + $0x208] sm:$0xff]
    %v189 = vld [vmem:[%s3 + $0x210] sm:$0xf]
    %v190 = vld [vmem:[%s3 + $0x214] sm:$0xff]
    %v191 = vld [vmem:[%s3 + $0x21c] sm:$0xff]
    %v192 = vld [vmem:[%s3 + $0x224] sm:$0xff]
    %v193 = vld [vmem:[%s3 + $0x22c] sm:$0xf]
    %v194 = vld [vmem:[%s3 + $0x230] sm:$0xff]
    %v195 = vld [vmem:[%s3 + $0x238] sm:$0xff]
    %v196 = vld [vmem:[%s3 + $0x240] sm:$0xff]
    %v197 = vld [vmem:[%s3 + $0x248] sm:$0xf]
    %v198 = vld [vmem:[%s3 + $0x24c] sm:$0xff]
    %v199 = vld [vmem:[%s3 + $0x254] sm:$0xff]
    %v200 = vld [vmem:[%s3 + $0x25c] sm:$0xff]
    %v201 = vld [vmem:[%s3 + $0x264] sm:$0xf]
    %v202 = vld [vmem:[%s3 + $0x268] sm:$0xff]
    %v203 = vld [vmem:[%s3 + $0x270] sm:$0xff]
    %v204 = vld [vmem:[%s3 + $0x278] sm:$0xff]
    %v205 = vld [vmem:[%s3 + $0x280] sm:$0xf]
    %v206 = vld [vmem:[%s3 + $0x284] sm:$0xff]
    %v207 = vld [vmem:[%s3 + $0x28c] sm:$0xff]
    %v208 = vld [vmem:[%s3 + $0x294] sm:$0xff]
    %v209 = vld [vmem:[%s3 + $0x29c] sm:$0xf]
    %v210 = vld [vmem:[%s3 + $0x2a0] sm:$0xff]
    %v211 = vld [vmem:[%s3 + $0x2a8] sm:$0xff]
    %v212 = vld [vmem:[%s3 + $0x2b0] sm:$0xff]
    %v213 = vld [vmem:[%s3 + $0x2b8] sm:$0xf]
    %v214 = vld [vmem:[%s3 + $0x2bc] sm:$0xff]
    %v215 = vld [vmem:[%s3 + $0x2c4] sm:$0xff]
    %v216 = vld [vmem:[%s3 + $0x2cc] sm:$0xff]
    %v217 = vld [vmem:[%s3 + $0x2d4] sm:$0xf]
    %v218 = vld [vmem:[%s3 + $0x2d8] sm:$0xff]
    %v219 = vld [vmem:[%s3 + $0x2e0] sm:$0xff]
    %v220 = vld [vmem:[%s3 + $0x2e8] sm:$0xff]
    %v221 = vld [vmem:[%s3 + $0x2f0] sm:$0xf]
    %v222 = vld [vmem:[%s3 + $0x2f4] sm:$0xff]
    %v223 = vld [vmem:[%s3 + $0x2fc] sm:$0xff]
    %v224 = vld [vmem:[%s3 + $0x304] sm:$0xff]
    %v225 = vld [vmem:[%s3 + $0x30c] sm:$0xf]
    %v226 = vld [vmem:[%s3 + $0x310] sm:$0xff]
    %v227 = vld [vmem:[%s3 + $0x318] sm:$0xff]
    %v228 = vld [vmem:[%s3 + $0x320] sm:$0xff]
    %v229 = vld [vmem:[%s3 + $0x328] sm:$0xf]
    %v230 = vld [vmem:[%s3 + $0x32c] sm:$0xff]
    %v231 = vld [vmem:[%s3 + $0x334] sm:$0xff]
    %v232 = vld [vmem:[%s3 + $0x33c] sm:$0xff]
    %v233 = vld [vmem:[%s3 + $0x344] sm:$0xf]
    %v234 = vld [vmem:[%s3 + $0x348] sm:$0xff]
    %v235 = vld [vmem:[%s3 + $0x350] sm:$0xff]
    %v236 = vld [vmem:[%s3 + $0x358] sm:$0xff]
    %v237 = vld [vmem:[%s3 + $0x360] sm:$0xf]
    %v238 = vld [vmem:[%s3 + $0x364] sm:$0xff]
    %v239 = vld [vmem:[%s3 + $0x36c] sm:$0xff]
    %v240 = vld [vmem:[%s3 + $0x374] sm:$0xff]
    %v241 = vld [vmem:[%s3 + $0x37c] sm:$0xf]
    %v242 = vld [vmem:[%s4] sm:$0x7f]
    %v244 = vlaneseq
    %v245 = vshrl.u32 %v244, 7
    %v246 = vsub.s32 0, %v245
    %v247 = vrot.slane %v242, %v246
    %v248 = vlaneseq
    %v249 = vshrl.u32 %v248, 7
    %v250 = vsub.s32 1, %v249
    %v251 = vrot.slane %v242, %v250
    %v252 = vlaneseq
    %v253 = vshrl.u32 %v252, 7
    %v254 = vsub.s32 2, %v253
    %v255 = vrot.slane %v242, %v254
    %v256 = vlaneseq
    %v257 = vshrl.u32 %v256, 7
    %v258 = vsub.s32 3, %v257
    %v259 = vrot.slane %v242, %v258
    %v260 = vlaneseq
    %v261 = vshrl.u32 %v260, 7
    %v262 = vsub.s32 4, %v261
    %v263 = vrot.slane %v242, %v262
    %v264 = vlaneseq
    %v265 = vshrl.u32 %v264, 7
    %v266 = vsub.s32 5, %v265
    %v267 = vrot.slane %v242, %v266
    %v268 = vlaneseq
    %v269 = vshrl.u32 %v268, 7
    %v270 = vsub.s32 6, %v269
    %v271 = vrot.slane %v242, %v270
    %v407 = vunpack.c.l.b16 %v114
    %v408 = vunpack.c.h.b16 %v114
    %v409 = vunpack.c.l.b16 %v115
    %v410 = vunpack.c.h.b16 %v115
    %v411 = vunpack.c.l.b16 %v116
    %v412 = vunpack.c.h.b16 %v116
    %v413 = vunpack.c.l.b16 %v117
    %v414 = vunpack.c.l.b16 %v118
    %v415 = vunpack.c.h.b16 %v118
    %v416 = vunpack.c.l.b16 %v119
    %v417 = vunpack.c.h.b16 %v119
    %v418 = vunpack.c.l.b16 %v120
    %v419 = vunpack.c.h.b16 %v120
    %v420 = vunpack.c.l.b16 %v121
    %v421 = vunpack.c.l.b16 %v122
    %v422 = vunpack.c.h.b16 %v122
    %v423 = vunpack.c.l.b16 %v123
    %v424 = vunpack.c.h.b16 %v123
    %v425 = vunpack.c.l.b16 %v124
    %v426 = vunpack.c.h.b16 %v124
    %v427 = vunpack.c.l.b16 %v125
    %v428 = vunpack.c.l.b16 %v126
    %v429 = vunpack.c.h.b16 %v126
    %v430 = vunpack.c.l.b16 %v127
    %v431 = vunpack.c.h.b16 %v127
    %v432 = vunpack.c.l.b16 %v128
    %v433 = vunpack.c.h.b16 %v128
    %v434 = vunpack.c.l.b16 %v129
    %v435 = vunpack.c.l.b16 %v130
    %v436 = vunpack.c.h.b16 %v130
    %v437 = vunpack.c.l.b16 %v131
    %v438 = vunpack.c.h.b16 %v131
    %v439 = vunpack.c.l.b16 %v132
    %v440 = vunpack.c.h.b16 %v132
    %v441 = vunpack.c.l.b16 %v133
    %v442 = vunpack.c.l.b16 %v134
    %v443 = vunpack.c.h.b16 %v134
    %v444 = vunpack.c.l.b16 %v135
    %v445 = vunpack.c.h.b16 %v135
    %v446 = vunpack.c.l.b16 %v136
    %v447 = vunpack.c.h.b16 %v136
    %v448 = vunpack.c.l.b16 %v137
    %v449 = vunpack.c.l.b16 %v138
    %v450 = vunpack.c.h.b16 %v138
    %v451 = vunpack.c.l.b16 %v139
    %v452 = vunpack.c.h.b16 %v139
    %v453 = vunpack.c.l.b16 %v140
    %v454 = vunpack.c.h.b16 %v140
    %v455 = vunpack.c.l.b16 %v141
    %v456 = vunpack.c.l.b16 %v142
    %v457 = vunpack.c.h.b16 %v142
    %v458 = vunpack.c.l.b16 %v143
    %v459 = vunpack.c.h.b16 %v143
    %v460 = vunpack.c.l.b16 %v144
    %v461 = vunpack.c.h.b16 %v144
    %v462 = vunpack.c.l.b16 %v145
    %v463 = vunpack.c.l.b16 %v146
    %v464 = vunpack.c.h.b16 %v146
    %v465 = vunpack.c.l.b16 %v147
    %v466 = vunpack.c.h.b16 %v147
    %v467 = vunpack.c.l.b16 %v148
    %v468 = vunpack.c.h.b16 %v148
    %v469 = vunpack.c.l.b16 %v149
    %v470 = vunpack.c.l.b16 %v150
    %v471 = vunpack.c.h.b16 %v150
    %v472 = vunpack.c.l.b16 %v151
    %v473 = vunpack.c.h.b16 %v151
    %v474 = vunpack.c.l.b16 %v152
    %v475 = vunpack.c.h.b16 %v152
    %v476 = vunpack.c.l.b16 %v153
    %v477 = vunpack.c.l.b16 %v154
    %v478 = vunpack.c.h.b16 %v154
    %v479 = vunpack.c.l.b16 %v155
    %v480 = vunpack.c.h.b16 %v155
    %v481 = vunpack.c.l.b16 %v156
    %v482 = vunpack.c.h.b16 %v156
    %v483 = vunpack.c.l.b16 %v157
    %v484 = vunpack.c.l.b16 %v158
    %v485 = vunpack.c.h.b16 %v158
    %v486 = vunpack.c.l.b16 %v159
    %v487 = vunpack.c.h.b16 %v159
    %v488 = vunpack.c.l.b16 %v160
    %v489 = vunpack.c.h.b16 %v160
    %v490 = vunpack.c.l.b16 %v161
    %v491 = vunpack.c.l.b16 %v162
    %v492 = vunpack.c.h.b16 %v162
    %v493 = vunpack.c.l.b16 %v163
    %v494 = vunpack.c.h.b16 %v163
    %v495 = vunpack.c.l.b16 %v164
    %v496 = vunpack.c.h.b16 %v164
    %v497 = vunpack.c.l.b16 %v165
    %v498 = vunpack.c.l.b16 %v166
    %v499 = vunpack.c.h.b16 %v166
    %v500 = vunpack.c.l.b16 %v167
    %v501 = vunpack.c.h.b16 %v167
    %v502 = vunpack.c.l.b16 %v168
    %v503 = vunpack.c.h.b16 %v168
    %v504 = vunpack.c.l.b16 %v169
    %v505 = vunpack.c.l.b16 %v170
    %v506 = vunpack.c.h.b16 %v170
    %v507 = vunpack.c.l.b16 %v171
    %v508 = vunpack.c.h.b16 %v171
    %v509 = vunpack.c.l.b16 %v172
    %v510 = vunpack.c.h.b16 %v172
    %v511 = vunpack.c.l.b16 %v173
    %v512 = vunpack.c.l.b16 %v174
    %v513 = vunpack.c.h.b16 %v174
    %v514 = vunpack.c.l.b16 %v175
    %v515 = vunpack.c.h.b16 %v175
    %v516 = vunpack.c.l.b16 %v176
    %v517 = vunpack.c.h.b16 %v176
    %v518 = vunpack.c.l.b16 %v177
    %v519 = vunpack.c.l.b16 %v178
    %v520 = vunpack.c.h.b16 %v178
    %v521 = vunpack.c.l.b16 %v179
    %v522 = vunpack.c.h.b16 %v179
    %v523 = vunpack.c.l.b16 %v180
    %v524 = vunpack.c.h.b16 %v180
    %v525 = vunpack.c.l.b16 %v181
    %v526 = vunpack.c.l.b16 %v182
    %v527 = vunpack.c.h.b16 %v182
    %v528 = vunpack.c.l.b16 %v183
    %v529 = vunpack.c.h.b16 %v183
    %v530 = vunpack.c.l.b16 %v184
    %v531 = vunpack.c.h.b16 %v184
    %v532 = vunpack.c.l.b16 %v185
    %v533 = vunpack.c.l.b16 %v186
    %v534 = vunpack.c.h.b16 %v186
    %v535 = vunpack.c.l.b16 %v187
    %v536 = vunpack.c.h.b16 %v187
    %v537 = vunpack.c.l.b16 %v188
    %v538 = vunpack.c.h.b16 %v188
    %v539 = vunpack.c.l.b16 %v189
    %v540 = vunpack.c.l.b16 %v190
    %v541 = vunpack.c.h.b16 %v190
    %v542 = vunpack.c.l.b16 %v191
    %v543 = vunpack.c.h.b16 %v191
    %v544 = vunpack.c.l.b16 %v192
    %v545 = vunpack.c.h.b16 %v192
    %v546 = vunpack.c.l.b16 %v193
    %v547 = vunpack.c.l.b16 %v194
    %v548 = vunpack.c.h.b16 %v194
    %v549 = vunpack.c.l.b16 %v195
    %v550 = vunpack.c.h.b16 %v195
    %v551 = vunpack.c.l.b16 %v196
    %v552 = vunpack.c.h.b16 %v196
    %v553 = vunpack.c.l.b16 %v197
    %v554 = vunpack.c.l.b16 %v198
    %v555 = vunpack.c.h.b16 %v198
    %v556 = vunpack.c.l.b16 %v199
    %v557 = vunpack.c.h.b16 %v199
    %v558 = vunpack.c.l.b16 %v200
    %v559 = vunpack.c.h.b16 %v200
    %v560 = vunpack.c.l.b16 %v201
    %v561 = vunpack.c.l.b16 %v202
    %v562 = vunpack.c.h.b16 %v202
    %v563 = vunpack.c.l.b16 %v203
    %v564 = vunpack.c.h.b16 %v203
    %v565 = vunpack.c.l.b16 %v204
    %v566 = vunpack.c.h.b16 %v204
    %v567 = vunpack.c.l.b16 %v205
    %v568 = vunpack.c.l.b16 %v206
    %v569 = vunpack.c.h.b16 %v206
    %v570 = vunpack.c.l.b16 %v207
    %v571 = vunpack.c.h.b16 %v207
    %v572 = vunpack.c.l.b16 %v208
    %v573 = vunpack.c.h.b16 %v208
    %v574 = vunpack.c.l.b16 %v209
    %v575 = vunpack.c.l.b16 %v210
    %v576 = vunpack.c.h.b16 %v210
    %v577 = vunpack.c.l.b16 %v211
    %v578 = vunpack.c.h.b16 %v211
    %v579 = vunpack.c.l.b16 %v212
    %v580 = vunpack.c.h.b16 %v212
    %v581 = vunpack.c.l.b16 %v213
    %v582 = vunpack.c.l.b16 %v214
    %v583 = vunpack.c.h.b16 %v214
    %v584 = vunpack.c.l.b16 %v215
    %v585 = vunpack.c.h.b16 %v215
    %v586 = vunpack.c.l.b16 %v216
    %v587 = vunpack.c.h.b16 %v216
    %v588 = vunpack.c.l.b16 %v217
    %v589 = vunpack.c.l.b16 %v218
    %v590 = vunpack.c.h.b16 %v218
    %v591 = vunpack.c.l.b16 %v219
    %v592 = vunpack.c.h.b16 %v219
    %v593 = vunpack.c.l.b16 %v220
    %v594 = vunpack.c.h.b16 %v220
    %v595 = vunpack.c.l.b16 %v221
    %v596 = vunpack.c.l.b16 %v222
    %v597 = vunpack.c.h.b16 %v222
    %v598 = vunpack.c.l.b16 %v223
    %v599 = vunpack.c.h.b16 %v223
    %v600 = vunpack.c.l.b16 %v224
    %v601 = vunpack.c.h.b16 %v224
    %v602 = vunpack.c.l.b16 %v225
    %v603 = vunpack.c.l.b16 %v226
    %v604 = vunpack.c.h.b16 %v226
    %v605 = vunpack.c.l.b16 %v227
    %v606 = vunpack.c.h.b16 %v227
    %v607 = vunpack.c.l.b16 %v228
    %v608 = vunpack.c.h.b16 %v228
    %v609 = vunpack.c.l.b16 %v229
    %v610 = vunpack.c.l.b16 %v230
    %v611 = vunpack.c.h.b16 %v230
    %v612 = vunpack.c.l.b16 %v231
    %v613 = vunpack.c.h.b16 %v231
    %v614 = vunpack.c.l.b16 %v232
    %v615 = vunpack.c.h.b16 %v232
    %v616 = vunpack.c.l.b16 %v233
    %v617 = vunpack.c.l.b16 %v234
    %v618 = vunpack.c.h.b16 %v234
    %v619 = vunpack.c.l.b16 %v235
    %v620 = vunpack.c.h.b16 %v235
    %v621 = vunpack.c.l.b16 %v236
    %v622 = vunpack.c.h.b16 %v236
    %v623 = vunpack.c.l.b16 %v237
    %v624 = vunpack.c.l.b16 %v238
    %v625 = vunpack.c.h.b16 %v238
    %v626 = vunpack.c.l.b16 %v239
    %v627 = vunpack.c.h.b16 %v239
    %v628 = vunpack.c.l.b16 %v240
    %v629 = vunpack.c.h.b16 %v240
    %v630 = vunpack.c.l.b16 %v241
    %v631 = vpack.c.b16 %v414, %v407
    %v632 = vpack.c.b16 %v415, %v408
    %v633 = vpack.c.b16 %v416, %v409
    %v634 = vpack.c.b16 %v417, %v410
    %v635 = vpack.c.b16 %v418, %v411
    %v636 = vpack.c.b16 %v419, %v412
    %v637 = vpack.c.b16 %v420, %v413
    %v638 = vpack.c.b16 %v428, %v421
    %v639 = vpack.c.b16 %v429, %v422
    %v640 = vpack.c.b16 %v430, %v423
    %v641 = vpack.c.b16 %v431, %v424
    %v642 = vpack.c.b16 %v432, %v425
    %v643 = vpack.c.b16 %v433, %v426
    %v644 = vpack.c.b16 %v434, %v427
    %v645 = vpack.c.b16 %v442, %v435
    %v646 = vpack.c.b16 %v443, %v436
    %v647 = vpack.c.b16 %v444, %v437
    %v648 = vpack.c.b16 %v445, %v438
    %v649 = vpack.c.b16 %v446, %v439
    %v650 = vpack.c.b16 %v447, %v440
    %v651 = vpack.c.b16 %v448, %v441
    %v652 = vpack.c.b16 %v456, %v449
    %v653 = vpack.c.b16 %v457, %v450
    %v654 = vpack.c.b16 %v458, %v451
    %v655 = vpack.c.b16 %v459, %v452
    %v656 = vpack.c.b16 %v460, %v453
    %v657 = vpack.c.b16 %v461, %v454
    %v658 = vpack.c.b16 %v462, %v455
    %v659 = vpack.c.b16 %v470, %v463
    %v660 = vpack.c.b16 %v471, %v464
    %v661 = vpack.c.b16 %v472, %v465
    %v662 = vpack.c.b16 %v473, %v466
    %v663 = vpack.c.b16 %v474, %v467
    %v664 = vpack.c.b16 %v475, %v468
    %v665 = vpack.c.b16 %v476, %v469
    %v666 = vpack.c.b16 %v484, %v477
    %v667 = vpack.c.b16 %v485, %v478
    %v668 = vpack.c.b16 %v486, %v479
    %v669 = vpack.c.b16 %v487, %v480
    %v670 = vpack.c.b16 %v488, %v481
    %v671 = vpack.c.b16 %v489, %v482
    %v672 = vpack.c.b16 %v490, %v483
    %v673 = vpack.c.b16 %v498, %v491
    %v674 = vpack.c.b16 %v499, %v492
    %v675 = vpack.c.b16 %v500, %v493
    %v676 = vpack.c.b16 %v501, %v494
    %v677 = vpack.c.b16 %v502, %v495
    %v678 = vpack.c.b16 %v503, %v496
    %v679 = vpack.c.b16 %v504, %v497
    %v680 = vpack.c.b16 %v512, %v505
    %v681 = vpack.c.b16 %v513, %v506
    %v682 = vpack.c.b16 %v514, %v507
    %v683 = vpack.c.b16 %v515, %v508
    %v684 = vpack.c.b16 %v516, %v509
    %v685 = vpack.c.b16 %v517, %v510
    %v686 = vpack.c.b16 %v518, %v511
    %v687 = vpack.c.b16 %v526, %v519
    %v688 = vpack.c.b16 %v527, %v520
    %v689 = vpack.c.b16 %v528, %v521
    %v690 = vpack.c.b16 %v529, %v522
    %v691 = vpack.c.b16 %v530, %v523
    %v692 = vpack.c.b16 %v531, %v524
    %v693 = vpack.c.b16 %v532, %v525
    %v694 = vpack.c.b16 %v540, %v533
    %v695 = vpack.c.b16 %v541, %v534
    %v696 = vpack.c.b16 %v542, %v535
    %v697 = vpack.c.b16 %v543, %v536
    %v698 = vpack.c.b16 %v544, %v537
    %v699 = vpack.c.b16 %v545, %v538
    %v700 = vpack.c.b16 %v546, %v539
    %v701 = vpack.c.b16 %v554, %v547
    %v702 = vpack.c.b16 %v555, %v548
    %v703 = vpack.c.b16 %v556, %v549
    %v704 = vpack.c.b16 %v557, %v550
    %v705 = vpack.c.b16 %v558, %v551
    %v706 = vpack.c.b16 %v559, %v552
    %v707 = vpack.c.b16 %v560, %v553
    %v708 = vpack.c.b16 %v568, %v561
    %v709 = vpack.c.b16 %v569, %v562
    %v710 = vpack.c.b16 %v570, %v563
    %v711 = vpack.c.b16 %v571, %v564
    %v712 = vpack.c.b16 %v572, %v565
    %v713 = vpack.c.b16 %v573, %v566
    %v714 = vpack.c.b16 %v574, %v567
    %v715 = vpack.c.b16 %v582, %v575
    %v716 = vpack.c.b16 %v583, %v576
    %v717 = vpack.c.b16 %v584, %v577
    %v718 = vpack.c.b16 %v585, %v578
    %v719 = vpack.c.b16 %v586, %v579
    %v720 = vpack.c.b16 %v587, %v580
    %v721 = vpack.c.b16 %v588, %v581
    %v722 = vpack.c.b16 %v596, %v589
    %v723 = vpack.c.b16 %v597, %v590
    %v724 = vpack.c.b16 %v598, %v591
    %v725 = vpack.c.b16 %v599, %v592
    %v726 = vpack.c.b16 %v600, %v593
    %v727 = vpack.c.b16 %v601, %v594
    %v728 = vpack.c.b16 %v602, %v595
    %v729 = vpack.c.b16 %v610, %v603
    %v730 = vpack.c.b16 %v611, %v604
    %v731 = vpack.c.b16 %v612, %v605
    %v732 = vpack.c.b16 %v613, %v606
    %v733 = vpack.c.b16 %v614, %v607
    %v734 = vpack.c.b16 %v615, %v608
    %v735 = vpack.c.b16 %v616, %v609
    %v736 = vpack.c.b16 %v624, %v617
    %v737 = vpack.c.b16 %v625, %v618
    %v738 = vpack.c.b16 %v626, %v619
    %v739 = vpack.c.b16 %v627, %v620
    %v740 = vpack.c.b16 %v628, %v621
    %v741 = vpack.c.b16 %v629, %v622
    %v742 = vpack.c.b16 %v630, %v623
    %855 = vmatprep.subr.bf16.mxu0 %v681
    %856 = vmatpush1.bf16.msra.mxu0 %v680
    %857 = vmatprep.subr.bf16.mxu0 %v674
    %858 = vmatpush1.bf16.msra.mxu0 %v673
    %859 = vmatprep.subr.bf16.mxu0 %v667
    %860 = vmatpush1.bf16.msra.mxu0 %v666
    %861 = vmatprep.subr.bf16.mxu0 %v660
    %862 = vmatpush1.bf16.msra.mxu0 %v659
    %863 = vmatprep.subr.bf16.mxu0 %v653
    %864 = vmatpush1.bf16.msra.mxu0 %v652
    %865 = vmatprep.subr.bf16.mxu0 %v646
    %866 = vmatpush1.bf16.msra.mxu0 %v645
    %867 = vmatprep.subr.bf16.mxu0 %v639
    %868 = vmatpush1.bf16.msra.mxu0 %v638
    %869 = vmatprep.subr.bf16.mxu0 %v632
    %870 = vmatpush1.bf16.msra.mxu0 %v631
    %871 = vmatprep.subr.bf16.mxu0 %v737
    %872 = vmatpush2.bf16.msra.mxu0 %v736
    %873 = vmatprep.subr.bf16.mxu0 %v730
    %874 = vmatpush2.bf16.msra.mxu0 %v729
    %875 = vmatprep.subr.bf16.mxu0 %v723
    %876 = vmatpush2.bf16.msra.mxu0 %v722
    %877 = vmatprep.subr.bf16.mxu0 %v716
    %878 = vmatpush2.bf16.msra.mxu0 %v715
    %879 = vmatprep.subr.bf16.mxu0 %v709
    %880 = vmatpush2.bf16.msra.mxu0 %v708
    %881 = vmatprep.subr.bf16.mxu0 %v702
    %882 = vmatpush2.bf16.msra.mxu0 %v701
    %883 = vmatprep.subr.bf16.mxu0 %v695
    %884 = vmatpush2.bf16.msra.mxu0 %v694
    %885 = vmatprep.subr.bf16.mxu0 %v688
    %886 = vmatpush2.bf16.msra.mxu0 %v687
    %887 = vmatprep.mubr.bf16.mxu0 %v113
    %888 = vmatmul.mubr.bf16.gmra.mxu0 %v112
    %v889 = vpop.f32.mrf.mxu0
    %v890 = vadd.f32 %v247, %v889
    %v891 = vpop.f32.mrf.mxu0
    %v892 = vadd.f32 %v251, %v891
    %v893 = vpop.f32.mrf.mxu0
    %v894 = vadd.f32 %v247, %v893
    %v895 = vpop.f32.mrf.mxu0
    %v896 = vadd.f32 %v251, %v895
    %897 = vdwg.mxu0
    %898 = vmatprep.subr.bf16.mxu0 %v683
    %899 = vmatpush1.bf16.msra.mxu0 %v682
    %900 = vmatprep.subr.bf16.mxu0 %v676
    %901 = vmatpush1.bf16.msra.mxu0 %v675
    %902 = vmatprep.subr.bf16.mxu0 %v669
    %903 = vmatpush1.bf16.msra.mxu0 %v668
    %904 = vmatprep.subr.bf16.mxu0 %v662
    %905 = vmatpush1.bf16.msra.mxu0 %v661
    %906 = vmatprep.subr.bf16.mxu0 %v655
    %907 = vmatpush1.bf16.msra.mxu0 %v654
    %908 = vmatprep.subr.bf16.mxu0 %v648
    %909 = vmatpush1.bf16.msra.mxu0 %v647
    %910 = vmatprep.subr.bf16.mxu0 %v641
    %911 = vmatpush1.bf16.msra.mxu0 %v640
    %912 = vmatprep.subr.bf16.mxu0 %v634
    %913 = vmatpush1.bf16.msra.mxu0 %v633
    %914 = vmatprep.subr.bf16.mxu0 %v739
    %915 = vmatpush2.bf16.msra.mxu0 %v738
    %916 = vmatprep.subr.bf16.mxu0 %v732
    %917 = vmatpush2.bf16.msra.mxu0 %v731
    %918 = vmatprep.subr.bf16.mxu0 %v725
    %919 = vmatpush2.bf16.msra.mxu0 %v724
    %920 = vmatprep.subr.bf16.mxu0 %v718
    %921 = vmatpush2.bf16.msra.mxu0 %v717
    %922 = vmatprep.subr.bf16.mxu0 %v711
    %923 = vmatpush2.bf16.msra.mxu0 %v710
    %924 = vmatprep.subr.bf16.mxu0 %v704
    %925 = vmatpush2.bf16.msra.mxu0 %v703
    %926 = vmatprep.subr.bf16.mxu0 %v697
    %927 = vmatpush2.bf16.msra.mxu0 %v696
    %928 = vmatprep.subr.bf16.mxu0 %v690
    %929 = vmatpush2.bf16.msra.mxu0 %v689
    %930 = vmatprep.mubr.bf16.mxu0 %v113
    %931 = vmatmul.mubr.bf16.gmra.mxu0 %v112
    %v932 = vpop.f32.mrf.mxu0
    %v933 = vadd.f32 %v255, %v932
    %v934 = vpop.f32.mrf.mxu0
    %v935 = vadd.f32 %v259, %v934
    %v936 = vpop.f32.mrf.mxu0
    %v937 = vadd.f32 %v255, %v936
    %v938 = vpop.f32.mrf.mxu0
    %v939 = vadd.f32 %v259, %v938
    %940 = vdwg.mxu0
    %941 = vmatprep.subr.bf16.mxu0 %v685
    %942 = vmatpush1.bf16.msra.mxu0 %v684
    %943 = vmatprep.subr.bf16.mxu0 %v678
    %944 = vmatpush1.bf16.msra.mxu0 %v677
    %945 = vmatprep.subr.bf16.mxu0 %v671
    %946 = vmatpush1.bf16.msra.mxu0 %v670
    %947 = vmatprep.subr.bf16.mxu0 %v664
    %948 = vmatpush1.bf16.msra.mxu0 %v663
    %949 = vmatprep.subr.bf16.mxu0 %v657
    %950 = vmatpush1.bf16.msra.mxu0 %v656
    %951 = vmatprep.subr.bf16.mxu0 %v650
    %952 = vmatpush1.bf16.msra.mxu0 %v649
    %953 = vmatprep.subr.bf16.mxu0 %v643
    %954 = vmatpush1.bf16.msra.mxu0 %v642
    %955 = vmatprep.subr.bf16.mxu0 %v636
    %956 = vmatpush1.bf16.msra.mxu0 %v635
    %957 = vmatprep.subr.bf16.mxu0 %v741
    %958 = vmatpush2.bf16.msra.mxu0 %v740
    %959 = vmatprep.subr.bf16.mxu0 %v734
    %960 = vmatpush2.bf16.msra.mxu0 %v733
    %961 = vmatprep.subr.bf16.mxu0 %v727
    %962 = vmatpush2.bf16.msra.mxu0 %v726
    %963 = vmatprep.subr.bf16.mxu0 %v720
    %964 = vmatpush2.bf16.msra.mxu0 %v719
    %965 = vmatprep.subr.bf16.mxu0 %v713
    %966 = vmatpush2.bf16.msra.mxu0 %v712
    %967 = vmatprep.subr.bf16.mxu0 %v706
    %968 = vmatpush2.bf16.msra.mxu0 %v705
    %969 = vmatprep.subr.bf16.mxu0 %v699
    %970 = vmatpush2.bf16.msra.mxu0 %v698
    %971 = vmatprep.subr.bf16.mxu0 %v692
    %972 = vmatpush2.bf16.msra.mxu0 %v691
    %973 = vmatprep.mubr.bf16.mxu0 %v113
    %974 = vmatmul.mubr.bf16.gmra.mxu0 %v112
    %v975 = vpop.f32.mrf.mxu0
    %v976 = vadd.f32 %v263, %v975
    %v977 = vpop.f32.mrf.mxu0
    %v978 = vadd.f32 %v267, %v977
    %v979 = vpop.f32.mrf.mxu0
    %v980 = vadd.f32 %v263, %v979
    %v981 = vpop.f32.mrf.mxu0
    %v982 = vadd.f32 %v267, %v981
    %983 = vdwg.mxu0
    %984 = vmatprep.subr.bf16.mxu0 0
    %985 = vmatpush1.bf16.msra.mxu0 %v686
    %986 = vmatprep.subr.bf16.mxu0 0
    %987 = vmatpush1.bf16.msra.mxu0 %v679
    %988 = vmatprep.subr.bf16.mxu0 0
    %989 = vmatpush1.bf16.msra.mxu0 %v672
    %990 = vmatprep.subr.bf16.mxu0 0
    %991 = vmatpush1.bf16.msra.mxu0 %v665
    %992 = vmatprep.subr.bf16.mxu0 0
    %993 = vmatpush1.bf16.msra.mxu0 %v658
    %994 = vmatprep.subr.bf16.mxu0 0
    %995 = vmatpush1.bf16.msra.mxu0 %v651
    %996 = vmatprep.subr.bf16.mxu0 0
    %997 = vmatpush1.bf16.msra.mxu0 %v644
    %998 = vmatprep.subr.bf16.mxu0 0
    %999 = vmatpush1.bf16.msra.mxu0 %v637
    %1000 = vmatprep.subr.bf16.mxu0 0
    %1001 = vmatpush2.bf16.msra.mxu0 %v742
    %1002 = vmatprep.subr.bf16.mxu0 0
    %1003 = vmatpush2.bf16.msra.mxu0 %v735
    %1004 = vmatprep.subr.bf16.mxu0 0
    %1005 = vmatpush2.bf16.msra.mxu0 %v728
    %1006 = vmatprep.subr.bf16.mxu0 0
    %1007 = vmatpush2.bf16.msra.mxu0 %v721
    %1008 = vmatprep.subr.bf16.mxu0 0
    %1009 = vmatpush2.bf16.msra.mxu0 %v714
    %1010 = vmatprep.subr.bf16.mxu0 0
    %1011 = vmatpush2.bf16.msra.mxu0 %v707
    %1012 = vmatprep.subr.bf16.mxu0 0
    %1013 = vmatpush2.bf16.msra.mxu0 %v700
    %1014 = vmatprep.subr.bf16.mxu0 0
    %1015 = vmatpush2.bf16.msra.mxu0 %v693
    %1016 = vmatprep.mubr.bf16.mxu0 %v113
    %1017 = vmatmul.mubr.bf16.gmra.mxu0 %v112
    %v1018 = vpop.f32.mrf.mxu0
    %v1019 = vadd.f32 %v271, %v1018
    %v1020 = vpop.f32.mrf.mxu0
    %v1021 = vpop.f32.mrf.mxu0
    %v1022 = vadd.f32 %v271, %v1021
    %v1023 = vpop.f32.mrf.mxu0
    %1024 = vdwg.mxu0
    %v1025 = vmul.f32 %v890, 0.5
    %v1026 = vmul.f32 %v892, 0.5
    %v1027 = vmul.f32 %v933, 0.5
    %v1028 = vmul.f32 %v935, 0.5
    %v1029 = vmul.f32 %v976, 0.5
    %v1030 = vmul.f32 %v978, 0.5
    %v1031 = vmul.f32 %v1019, 0.5
    %v1032 = vmul.f32 %v894, 0.5
    %v1033 = vmul.f32 %v896, 0.5
    %v1034 = vmul.f32 %v937, 0.5
    %v1035 = vmul.f32 %v939, 0.5
    %v1036 = vmul.f32 %v980, 0.5
    %v1037 = vmul.f32 %v982, 0.5
    %v1038 = vmul.f32 %v1022, 0.5
    %v1039 = vtanh.pop %v1025
    %v1040 = vtanh.pop %v1026
    %v1041 = vtanh.pop %v1027
    %v1042 = vtanh.pop %v1028
    %v1043 = vtanh.pop %v1029
    %v1044 = vtanh.pop %v1030
    %v1045 = vtanh.pop %v1031
    %v1046 = vtanh.pop %v1032
    %v1047 = vtanh.pop %v1033
    %v1048 = vtanh.pop %v1034
    %v1049 = vtanh.pop %v1035
    %v1050 = vtanh.pop %v1036
    %v1051 = vtanh.pop %v1037
    %v1052 = vtanh.pop %v1038
    %v1053 = vmul.f32 %v1039, 0.5
    %v1054 = vmul.f32 %v1040, 0.5
    %v1055 = vmul.f32 %v1041, 0.5
    %v1056 = vmul.f32 %v1042, 0.5
    %v1057 = vmul.f32 %v1043, 0.5
    %v1058 = vmul.f32 %v1044, 0.5
    %v1059 = vmul.f32 %v1045, 0.5
    %v1060 = vmul.f32 %v1046, 0.5
    %v1061 = vmul.f32 %v1047, 0.5
    %v1062 = vmul.f32 %v1048, 0.5
    %v1063 = vmul.f32 %v1049, 0.5
    %v1064 = vmul.f32 %v1050, 0.5
    %v1065 = vmul.f32 %v1051, 0.5
    %v1066 = vmul.f32 %v1052, 0.5
    %v1067 = vadd.f32 %v1053, 0.5
    %v1068 = vadd.f32 %v1054, 0.5
    %v1069 = vadd.f32 %v1055, 0.5
    %v1070 = vadd.f32 %v1056, 0.5
    %v1071 = vadd.f32 %v1057, 0.5
    %v1072 = vadd.f32 %v1058, 0.5
    %v1073 = vadd.f32 %v1059, 0.5
    %v1074 = vadd.f32 %v1060, 0.5
    %v1075 = vadd.f32 %v1061, 0.5
    %v1076 = vadd.f32 %v1062, 0.5
    %v1077 = vadd.f32 %v1063, 0.5
    %v1078 = vadd.f32 %v1064, 0.5
    %v1079 = vadd.f32 %v1065, 0.5
    %v1080 = vadd.f32 %v1066, 0.5
    %v1081 = vpack.c.bf16 %v1074, %v1067
    %v1082 = vpack.c.bf16 %v1075, %v1068
    %v1083 = vpack.c.bf16 %v1076, %v1069
    %v1084 = vpack.c.bf16 %v1077, %v1070
    %v1085 = vpack.c.bf16 %v1078, %v1071
    %v1086 = vpack.c.bf16 %v1079, %v1072
    %v1087 = vpack.c.bf16 %v1080, %v1073
    %v1095 = vcombine.low %v1081, %v1082
    %v1096 = vcombine.high %v1081, %v1082
    %v1097 = vcombine.low %v1083, %v1084
    %v1098 = vcombine.high %v1083, %v1084
    %v1099 = vcombine.low %v1085, %v1086
    %v1100 = vcombine.high %v1085, %v1086
    %v1101 = vcombine.high %v1087, %v1087
    %v1103 = vunpack.c.l.s4 1966171168
    %v1104 = vunpack.c.0.s8 %v1103
    %v1105 = vlaneseq
    %v1106 = vshrl.u32 %v1105, 7
    %v1107 = vsub.s32 %v1104, %v1106
    %v1108 = vrot.slane %v1095, %v1107
    %v1110 = vunpack.c.l.s4 1966171168
    %v1111 = vunpack.c.0.s8 %v1110
    %v1112 = vlaneseq
    %v1113 = vshrl.u32 %v1112, 7
    %v1114 = vsub.s32 %v1111, %v1113
    %v1115 = vrot.slane %v1096, %v1114
    %v1117 = vunpack.c.l.s4 1966171168
    %v1118 = vunpack.c.0.s8 %v1117
    %v1119 = vlaneseq
    %v1120 = vshrl.u32 %v1119, 7
    %v1121 = vsub.s32 %v1118, %v1120
    %v1122 = vrot.slane %v1097, %v1121
    %v1124 = vunpack.c.l.s4 1966171168
    %v1125 = vunpack.c.0.s8 %v1124
    %v1126 = vlaneseq
    %v1127 = vshrl.u32 %v1126, 7
    %v1128 = vsub.s32 %v1125, %v1127
    %v1129 = vrot.slane %v1098, %v1128
    %v1131 = vunpack.c.l.s4 1966171168
    %v1132 = vunpack.c.0.s8 %v1131
    %v1133 = vlaneseq
    %v1134 = vshrl.u32 %v1133, 7
    %v1135 = vsub.s32 %v1132, %v1134
    %v1136 = vrot.slane %v1099, %v1135
    %v1138 = vunpack.c.l.s4 1966171168
    %v1139 = vunpack.c.0.s8 %v1138
    %v1140 = vlaneseq
    %v1141 = vshrl.u32 %v1140, 7
    %v1142 = vsub.s32 %v1139, %v1141
    %v1143 = vrot.slane %v1100, %v1142
    %v1145 = vunpack.c.l.s4 1966171168
    %v1146 = vunpack.c.0.s8 %v1145
    %v1147 = vlaneseq
    %v1148 = vshrl.u32 %v1147, 7
    %v1149 = vsub.s32 %v1146, %v1148
    %v1150 = vrot.slane %v1087, %v1149
    %v1152 = vunpack.c.l.s4 1966171168
    %v1153 = vunpack.c.0.s8 %v1152
    %v1154 = vlaneseq
    %v1155 = vshrl.u32 %v1154, 7
    %v1156 = vsub.s32 %v1153, %v1155
    %v1157 = vrot.slane %v1101, %v1156
    %v1158 = vcombine.low %v1108, %v1122
    %v1159 = vcombine.high %v1108, %v1122
    %v1160 = vcombine.low %v1115, %v1129
    %v1161 = vcombine.high %v1115, %v1129
    %v1162 = vcombine.low %v1136, %v1150
    %v1163 = vcombine.high %v1136, %v1150
    %v1164 = vcombine.low %v1143, %v1157
    %v1165 = vcombine.high %v1143, %v1157
    %v1167 = vunpack.c.l.s4 1966171168
    %v1168 = vunpack.c.0.s8 %v1167
    %v1169 = vlaneseq
    %v1170 = vshrl.u32 %v1169, 7
    %v1171 = vsub.s32 %v1168, %v1170
    %v1172 = vrot.slane %v1158, %v1171
    %v1174 = vunpack.c.l.s4 1966171168
    %v1175 = vunpack.c.0.s8 %v1174
    %v1176 = vlaneseq
    %v1177 = vshrl.u32 %v1176, 7
    %v1178 = vsub.s32 %v1175, %v1177
    %v1179 = vrot.slane %v1160, %v1178
    %v1181 = vunpack.c.l.s4 1966171168
    %v1182 = vunpack.c.0.s8 %v1181
    %v1183 = vlaneseq
    %v1184 = vshrl.u32 %v1183, 7
    %v1185 = vsub.s32 %v1182, %v1184
    %v1186 = vrot.slane %v1159, %v1185
    %v1188 = vunpack.c.l.s4 1966171168
    %v1189 = vunpack.c.0.s8 %v1188
    %v1190 = vlaneseq
    %v1191 = vshrl.u32 %v1190, 7
    %v1192 = vsub.s32 %v1189, %v1191
    %v1193 = vrot.slane %v1161, %v1192
    %v1195 = vunpack.c.l.s4 1966171168
    %v1196 = vunpack.c.0.s8 %v1195
    %v1197 = vlaneseq
    %v1198 = vshrl.u32 %v1197, 7
    %v1199 = vsub.s32 %v1196, %v1198
    %v1200 = vrot.slane %v1162, %v1199
    %v1202 = vunpack.c.l.s4 1966171168
    %v1203 = vunpack.c.0.s8 %v1202
    %v1204 = vlaneseq
    %v1205 = vshrl.u32 %v1204, 7
    %v1206 = vsub.s32 %v1203, %v1205
    %v1207 = vrot.slane %v1164, %v1206
    %v1209 = vunpack.c.l.s4 1966171168
    %v1210 = vunpack.c.0.s8 %v1209
    %v1211 = vlaneseq
    %v1212 = vshrl.u32 %v1211, 7
    %v1213 = vsub.s32 %v1210, %v1212
    %v1214 = vrot.slane %v1163, %v1213
    %v1216 = vunpack.c.l.s4 1966171168
    %v1217 = vunpack.c.0.s8 %v1216
    %v1218 = vlaneseq
    %v1219 = vshrl.u32 %v1218, 7
    %v1220 = vsub.s32 %v1217, %v1219
    %v1221 = vrot.slane %v1165, %v1220
    %v1222 = vcombine.low %v1172, %v1200
    %v1223 = vcombine.high %v1172, %v1200
    %v1224 = vcombine.low %v1179, %v1207
    %v1225 = vcombine.high %v1179, %v1207
    %v1226 = vcombine.low %v1186, %v1214
    %v1227 = vcombine.high %v1186, %v1214
    %v1228 = vcombine.low %v1193, %v1221
    %v1229 = vcombine.high %v1193, %v1221
    %vm1238 = vcmask 1040384
    %vm1239 = vcmask 1041409
    %vm1240 = vmor %vm1239, %vm1238
    %vm1241 = vcmask 1042434
    %vm1242 = vmor %vm1241, %vm1240
    %vm1243 = vcmask 1043459
    %vm1244 = vmor %vm1243, %vm1242
    %vm1245 = vcmask 1044484
    %vm1246 = vmor %vm1245, %vm1244
    %vm1247 = vcmask 1045509
    %vm1248 = vmor %vm1247, %vm1246
    %vm1249 = vcmask 129030
    %vm1250 = vmor %vm1249, %vm1248
    %1251 = vst.msk [vmem:[#allocation2] sm:$0x7f] %vm1250, %v1222
    %1252 = vst.msk [vmem:[#allocation2 + $0x7] sm:$0x7f] %vm1250, %v1226
    %1253 = vst.msk [vmem:[#allocation2 + $0xe] sm:$0x7f] %vm1250, %v1223
    %1254 = vst.msk [vmem:[#allocation2 + $0x15] sm:$0x7f] %vm1250, %v1227
    %1255 = vst.msk [vmem:[#allocation2 + $0x1c] sm:$0x7f] %vm1250, %v1224
    %1256 = vst.msk [vmem:[#allocation2 + $0x23] sm:$0x7f] %vm1250, %v1228
    %1257 = vst.msk [vmem:[#allocation2 + $0x2a] sm:$0x7f] %vm1250, %v1225
    %1258 = vst.msk [vmem:[#allocation2 + $0x31] sm:$0x7f] %vm1250, %v1229
    // Predicated region
    $region22: #{tpu_custom_call.1} parent=1 // pred_check
      _
    $region23: #{tpu_custom_call.1} parent=1 // pred_check_branch
      %1260 = sbr.rel (0) target = $region25
    $region24: #{tpu_custom_call.1} parent=1 // pred_region
      %s1262 = ssub.s32 896, 112
      %1263 = vsyncadd [#allocation3], %s1262
      %s1264 = sshll.u32 [#allocation2], 4
      %s1265 = int_to_ptr.vmem [resolvable:$true] %s1264
      %1270 = dma.vmem_to_hbm [thread:$0]  %s1265, 112, %s5, [#allocation3], 112, 112, 7
    $region25: #{tpu_custom_call.1} parent=1 // pred_fallthru
      _
    // Predicated region
    $region26: #{tpu_custom_call.1} parent=1 // pred_check
      _
    $region27: #{tpu_custom_call.1} parent=1 // pred_check_branch
      %1272 = sbr.rel (0) target = $region29
    $region28: #{tpu_custom_call.1} parent=1 // pred_region
      %1273 = dma.done [#allocation3], 896
    $region29: #{tpu_custom_call.1} parent=1 // pred_fallthru
      _
    %1274 = vsyncpa [#allocation3], 1

</llo_original>
